<compile_context>
chip_gen: v7x
topology: tpu7x:2x2x1
jax: 0.10.0
libtpu: 0.0.40
codegen_flags: <defaults>
</compile_context>

<pallas_src>
import math
import jax
import jax.numpy as jnp
from jax.experimental import pallas as pl
from jax.experimental.pallas import tpu as pltpu


def _round_up(a: int, b: int) -> int:
    return (a + b - 1) // b * b


def mlp_softmax_kernel(x_ref, w1_ref, b1_ref, w2_ref, b2_ref, w3_ref, b3_ref,
                       m_ref, o_ref):
    mm_dtype = w1_ref.dtype            # matmul input dtype (f32 or bf16)

    # Linear 1 + ELU (alpha=1.0, PyTorch default).  x is already in mm_dtype
    # (cast once in the wrapper); accumulation is f32 on the MXU.
    h = jnp.dot(x_ref[...], w1_ref[...],
                preferred_element_type=jnp.float32) + b1_ref[...]
    # TODO(synk): jnp.expm1 would be slightly more accurate near 0 at the same
    # EUP cost; keeping exp-1 which is known to lower cleanly.
    h = jnp.where(h > 0, h, jnp.exp(h) - 1.0)

    # Linear 2 + ELU
    h = jnp.dot(h.astype(mm_dtype), w2_ref[...],
                preferred_element_type=jnp.float32) + b2_ref[...]
    h = jnp.where(h > 0, h, jnp.exp(h) - 1.0)

    # Linear 3 -> logits over the (narrow) OUT dimension
    logits = jnp.dot(h.astype(mm_dtype), w3_ref[...],
                     preferred_element_type=jnp.float32) + b3_ref[...]

    # masked_fill(~m, -inf) + numerically-stable softmax.
    # Masked entries become exact zeros; fully-masked rows (batch padding)
    # yield all-zero rows instead of NaN (intentional deviation from PyTorch).
    keep = m_ref[...] != 0
    neg_big = jnp.float32(-1e30)                      # finite stand-in for -inf
    masked_logits = jnp.where(keep, logits, neg_big)
    mx = jnp.max(masked_logits, axis=-1, keepdims=True)
    e = jnp.where(keep, jnp.exp(masked_logits - mx), 0.0)
    s = jnp.sum(e, axis=-1, keepdims=True)
    inv = pl.reciprocal(jnp.where(s > 0.0, s, 1.0), approx=True)   # EUP vrcp
    o_ref[...] = (e * inv).astype(o_ref.dtype)


def network_forward(x, params, m, *, tile_b=None, matmul_dtype=jnp.float32):
    """x: (B, in_nodes) f32; m: (B, out_nodes) bool/int (nonzero = keep).

    matmul_dtype=jnp.bfloat16 is recommended on v5e (bf16-native MXU) and for
    compute-bound large-B on v6e/v7x; accumulation stays f32 either way.
    """
    w1, b1, w2, b2, w3, b3 = params
    B, IN = x.shape
    H = w1.shape[1]
    OUT = w3.shape[1]

    # --- batch tiling ----------------------------------------------------------
    if tile_b is None:
        if B <= 256:
            tile_b = _round_up(B, 8)      # single small step, latency regime
        else:
            # Large tiles amortize the per-grid-step overhead; multiple of 256
            # fills the 256-wide MXU (v6e/v7x); >= 2 steps lets the "parallel"
            # axis shard across both v7x TensorCores.
            tile_b = min(1024, _round_up(pl.cdiv(B, 2), 256))
    Bp = _round_up(B, tile_b)

    # int8 mask (4x less mask DMA than int32); padded rows are fully masked.
    m = m.astype(jnp.int8)
    if Bp != B:
        x = jnp.pad(x, ((0, Bp - B), (0, 0)))
        m = jnp.pad(m, ((0, Bp - B), (0, 0)))

    # --- matmul-input dtype (cast once in the wrapper, not per grid step) ------
    x = x.astype(matmul_dtype)
    w1c = w1.astype(matmul_dtype)
    w2c = w2.astype(matmul_dtype)
    w3c = w3.astype(matmul_dtype)

    grid = (Bp // tile_b,)
    rep = lambda i: (0, 0)    # weights/biases: constant block index -> resident

    out = pl.pallas_call(
        mlp_softmax_kernel,
        out_shape=jax.ShapeDtypeStruct((Bp, OUT), jnp.float32),
        grid=grid,
        in_specs=[
            pl.BlockSpec((tile_b, IN), lambda i: (i, 0)),    # x
            pl.BlockSpec((IN, H), rep),                      # w1
            pl.BlockSpec((1, H), rep),                       # b1
            pl.BlockSpec((H, H), rep),                       # w2
            pl.BlockSpec((1, H), rep),                       # b2
            pl.BlockSpec((H, OUT), rep),                     # w3 (narrow OUT)
            pl.BlockSpec((1, OUT), rep),                     # b3
            pl.BlockSpec((tile_b, OUT), lambda i: (i, 0)),   # mask (int8, narrow)
        ],
        out_specs=pl.BlockSpec((tile_b, OUT), lambda i: (i, 0)),
        compiler_params=pltpu.CompilerParams(
            dimension_semantics=("parallel",)),
    )(x, w1c, b1, w2c, b2, w3c, b3, m)

    return out if Bp == B else out[:B]


def init_params(key, in_nodes, hidden, out_nodes):
    """Deterministic init mimicking torch.nn.Linear default (U(+-1/sqrt(fan_in)))."""
    ks = jax.random.split(key, 6)

    def lin(kw, kb, fan_in, fan_out):
        bound = 1.0 / math.sqrt(fan_in)
        w = jax.random.uniform(kw, (fan_in, fan_out), jnp.float32, -bound, bound)
        b = jax.random.uniform(kb, (1, fan_out), jnp.float32, -bound, bound)
        return w, b

    w1, b1 = lin(ks[0], ks[1], in_nodes, hidden)
    w2, b2 = lin(ks[2], ks[3], hidden, hidden)
    w3, b3 = lin(ks[4], ks[5], hidden, out_nodes)
    return (w1, b1, w2, b2, w3, b3)


def reference_forward(x, params, m):
    w1, b1, w2, b2, w3, b3 = params
    h = x @ w1 + b1
    h = jnp.where(h > 0, h, jnp.exp(h) - 1.0)
    h = h @ w2 + b2
    h = jnp.where(h > 0, h, jnp.exp(h) - 1.0)
    logits = h @ w3 + b3
    logits = jnp.where(m != 0, logits, -jnp.inf)
    return jax.nn.softmax(logits, axis=-1)


if __name__ == "__main__":
    key = jax.random.PRNGKey(0)
    k_param, k_x, k_m = jax.random.split(key, 3)

    B, IN_NODES, HIDDEN, OUT_NODES = 8, 32, 256, 16

    params = init_params(k_param, IN_NODES, HIDDEN, OUT_NODES)
    x = jax.random.normal(k_x, (B, IN_NODES), dtype=jnp.float32)

    # boolean action mask; guarantee at least one valid action per row
    m_bool = jax.random.uniform(k_m, (B, OUT_NODES)) > 0.3
    m_bool = m_bool.at[:, 0].set(True)

    # --- f32 path, small batch -------------------------------------------------
    out = jax.block_until_ready(network_forward(x, params, m_bool))
    ref = reference_forward(x, params, m_bool.astype(jnp.int32))
    assert out.shape == (B, OUT_NODES)
    assert jnp.allclose(out, ref, atol=1e-3, rtol=1e-3), "mismatch vs reference"
    assert jnp.all(jnp.where(m_bool, 0.0, out) == 0.0)   # masked -> exactly zero

    # --- batch-padding path (B not a multiple of 8) ------------------------------
    B2 = 10
    x2 = jax.random.normal(jax.random.PRNGKey(1), (B2, IN_NODES), dtype=jnp.float32)
    m2 = (jax.random.uniform(jax.random.PRNGKey(2), (B2, OUT_NODES)) > 0.3)
    m2 = m2.at[:, 0].set(True)
    out2 = jax.block_until_ready(network_forward(x2, params, m2))
    ref2 = reference_forward(x2, params, m2.astype(jnp.int32))
    assert out2.shape == (B2, OUT_NODES)
    assert jnp.allclose(out2, ref2, atol=1e-3, rtol=1e-3), "padded-batch mismatch"
    assert jnp.all(jnp.where(m2, 0.0, out2) == 0.0)

    # --- large-batch path (multi-step grid, 256-aligned tiles, row padding) -----
    B3 = 600
    x3 = jax.random.normal(jax.random.PRNGKey(3), (B3, IN_NODES), dtype=jnp.float32)
    m3 = (jax.random.uniform(jax.random.PRNGKey(4), (B3, OUT_NODES)) > 0.3)
    m3 = m3.at[:, 0].set(True)
    out3 = jax.block_until_ready(network_forward(x3, params, m3))
    ref3 = reference_forward(x3, params, m3.astype(jnp.int32))
    assert out3.shape == (B3, OUT_NODES)
    assert jnp.allclose(out3, ref3, atol=1e-3, rtol=1e-3), "large-batch mismatch"
    assert jnp.all(jnp.where(m3, 0.0, out3) == 0.0)

    # --- bf16 matmul fast path (recommended on v5e / large B on v6e,v7x) --------
    out_bf16 = jax.block_until_ready(
        network_forward(x, params, m_bool, matmul_dtype=jnp.bfloat16))
    assert out_bf16.shape == (B, OUT_NODES)
    assert jnp.all(jnp.where(m_bool, 0.0, out_bf16) == 0.0)
    assert jnp.allclose(jnp.sum(out_bf16, axis=-1), 1.0, atol=1e-2)

    print("KERNEL_OK")
</pallas_src>

<mosaic_0001>
module attributes {stable_mosaic.version = 11 : i64} {
  func.func @mlp_softmax_kernel(%arg0: i32, %arg1: memref<8x32xf32, #tpu.memory_space<vmem>>, %arg2: memref<32x256xf32, #tpu.memory_space<vmem>>, %arg3: memref<1x256xf32, #tpu.memory_space<vmem>>, %arg4: memref<256x256xf32, #tpu.memory_space<vmem>>, %arg5: memref<1x256xf32, #tpu.memory_space<vmem>>, %arg6: memref<256x16xf32, #tpu.memory_space<vmem>>, %arg7: memref<1x16xf32, #tpu.memory_space<vmem>>, %arg8: memref<8x16xi8, #tpu.memory_space<vmem>>, %arg9: memref<8x16xf32, #tpu.memory_space<vmem>>) attributes {dimension_semantics = [#tpu.dimension_semantics<parallel>], iteration_bounds = array<i64: 1>, scalar_prefetch = 0 : i64, scratch_operands = 0 : i64, tpu.core_type = #tpu.core_type<tc>, window_params = [{transform_indices = @transform_0, window_bounds = array<i64: 8, 32>}, {pipeline_mode = #tpu.pipeline_mode<synchronous>, transform_indices = @transform_1, window_bounds = array<i64: 32, 256>}, {pipeline_mode = #tpu.pipeline_mode<synchronous>, transform_indices = @transform_2, window_bounds = array<i64: 1, 256>}, {pipeline_mode = #tpu.pipeline_mode<synchronous>, transform_indices = @transform_3, window_bounds = array<i64: 256, 256>}, {pipeline_mode = #tpu.pipeline_mode<synchronous>, transform_indices = @transform_4, window_bounds = array<i64: 1, 256>}, {pipeline_mode = #tpu.pipeline_mode<synchronous>, transform_indices = @transform_5, window_bounds = array<i64: 256, 16>}, {pipeline_mode = #tpu.pipeline_mode<synchronous>, transform_indices = @transform_6, window_bounds = array<i64: 1, 16>}, {transform_indices = @transform_7, window_bounds = array<i64: 8, 16>}, {transform_indices = @transform_8, window_bounds = array<i64: 8, 16>}]} {
    %c0 = arith.constant 0 : index
    %c0_0 = arith.constant 0 : index
    %0 = vector.load %arg1[%c0, %c0_0] : memref<8x32xf32, #tpu.memory_space<vmem>>, vector<8x32xf32>
    %c0_1 = arith.constant 0 : index
    %c0_2 = arith.constant 0 : index
    %1 = vector.load %arg2[%c0_1, %c0_2] : memref<32x256xf32, #tpu.memory_space<vmem>>, vector<32x256xf32>
    %cst = arith.constant dense<0.000000e+00> : vector<8x256xf32>
    %2 = tpu.matmul %0, %1, %cst {dimension_numbers = #tpu.dot_dimension_numbers<[1], [0], [0], [1], [0, 0, 1, 1], [], []>} : vector<8x32xf32>, vector<32x256xf32>, vector<8x256xf32> -> vector<8x256xf32>
    %c0_3 = arith.constant 0 : index
    %c0_4 = arith.constant 0 : index
    %3 = vector.load %arg3[%c0_3, %c0_4] : memref<1x256xf32, #tpu.memory_space<vmem>>, vector<1x256xf32>
    %4 = vector.broadcast %3 : vector<1x256xf32> to vector<8x256xf32>
    %5 = arith.addf %2, %4 : vector<8x256xf32>
    %cst_5 = arith.constant 0.000000e+00 : f32
    %6 = vector.broadcast %cst_5 : f32 to vector<8x256xf32>
    %7 = arith.cmpf ogt, %5, %6 : vector<8x256xf32>
    %8 = math.exp %5 : vector<8x256xf32>
    %cst_6 = arith.constant 1.000000e+00 : f32
    %9 = vector.broadcast %cst_6 : f32 to vector<8x256xf32>
    %10 = arith.subf %8, %9 : vector<8x256xf32>
    %11 = arith.select %7, %5, %10 : vector<8x256xi1>, vector<8x256xf32>
    %c0_7 = arith.constant 0 : index
    %c0_8 = arith.constant 0 : index
    %12 = vector.load %arg4[%c0_7, %c0_8] : memref<256x256xf32, #tpu.memory_space<vmem>>, vector<256x256xf32>
    %cst_9 = arith.constant dense<0.000000e+00> : vector<8x256xf32>
    %13 = tpu.matmul %11, %12, %cst_9 {dimension_numbers = #tpu.dot_dimension_numbers<[1], [0], [0], [1], [0, 0, 1, 1], [], []>} : vector<8x256xf32>, vector<256x256xf32>, vector<8x256xf32> -> vector<8x256xf32>
    %c0_10 = arith.constant 0 : index
    %c0_11 = arith.constant 0 : index
    %14 = vector.load %arg5[%c0_10, %c0_11] : memref<1x256xf32, #tpu.memory_space<vmem>>, vector<1x256xf32>
    %15 = vector.broadcast %14 : vector<1x256xf32> to vector<8x256xf32>
    %16 = arith.addf %13, %15 : vector<8x256xf32>
    %cst_12 = arith.constant 0.000000e+00 : f32
    %17 = vector.broadcast %cst_12 : f32 to vector<8x256xf32>
    %18 = arith.cmpf ogt, %16, %17 : vector<8x256xf32>
    %19 = math.exp %16 : vector<8x256xf32>
    %cst_13 = arith.constant 1.000000e+00 : f32
    %20 = vector.broadcast %cst_13 : f32 to vector<8x256xf32>
    %21 = arith.subf %19, %20 : vector<8x256xf32>
    %22 = arith.select %18, %16, %21 : vector<8x256xi1>, vector<8x256xf32>
    %c0_14 = arith.constant 0 : index
    %c0_15 = arith.constant 0 : index
    %23 = vector.load %arg6[%c0_14, %c0_15] : memref<256x16xf32, #tpu.memory_space<vmem>>, vector<256x16xf32>
    %cst_16 = arith.constant dense<0.000000e+00> : vector<8x16xf32>
    %24 = tpu.matmul %22, %23, %cst_16 {dimension_numbers = #tpu.dot_dimension_numbers<[1], [0], [0], [1], [0, 0, 1, 1], [], []>} : vector<8x256xf32>, vector<256x16xf32>, vector<8x16xf32> -> vector<8x16xf32>
    %c0_17 = arith.constant 0 : index
    %c0_18 = arith.constant 0 : index
    %25 = vector.load %arg7[%c0_17, %c0_18] : memref<1x16xf32, #tpu.memory_space<vmem>>, vector<1x16xf32>
    %26 = vector.broadcast %25 : vector<1x16xf32> to vector<8x16xf32>
    %27 = arith.addf %24, %26 : vector<8x16xf32>
    %c0_19 = arith.constant 0 : index
    %c0_20 = arith.constant 0 : index
    %28 = vector.load %arg8[%c0_19, %c0_20] : memref<8x16xi8, #tpu.memory_space<vmem>>, vector<8x16xi8>
    %c0_i8 = arith.constant 0 : i8
    %29 = vector.broadcast %c0_i8 : i8 to vector<8x16xi8>
    %30 = arith.cmpi ne, %28, %29 : vector<8x16xi8>
    %cst_21 = arith.constant -1.000000e+30 : f32
    %31 = vector.broadcast %cst_21 : f32 to vector<8x16xf32>
    %32 = arith.select %30, %27, %31 : vector<8x16xi1>, vector<8x16xf32>
    %cst_22 = arith.constant dense<0xFF800000> : vector<8xf32>
    %33 = vector.multi_reduction <maximumf>, %32, %cst_22 [1] : vector<8x16xf32> to vector<8xf32>
    %34 = vector.shape_cast %33 : vector<8xf32> to vector<8x1xf32>
    %35 = vector.broadcast %34 : vector<8x1xf32> to vector<8x16xf32>
    %36 = arith.subf %32, %35 : vector<8x16xf32>
    %37 = math.exp %36 : vector<8x16xf32>
    %cst_23 = arith.constant 0.000000e+00 : f32
    %38 = vector.broadcast %cst_23 : f32 to vector<8x16xf32>
    %39 = arith.select %30, %37, %38 : vector<8x16xi1>, vector<8x16xf32>
    %cst_24 = arith.constant dense<0.000000e+00> : vector<8xf32>
    %40 = vector.multi_reduction <add>, %39, %cst_24 [1] : vector<8x16xf32> to vector<8xf32>
    %41 = vector.shape_cast %40 : vector<8xf32> to vector<8x1xf32>
    %cst_25 = arith.constant 0.000000e+00 : f32
    %42 = vector.broadcast %cst_25 : f32 to vector<8x1xf32>
    %43 = arith.cmpf ogt, %41, %42 : vector<8x1xf32>
    %cst_26 = arith.constant 1.000000e+00 : f32
    %44 = vector.broadcast %cst_26 : f32 to vector<8x1xf32>
    %45 = arith.select %43, %41, %44 : vector<8x1xi1>, vector<8x1xf32>
    %46 = tpu.reciprocal %45 {approx = true} : vector<8x1xf32> -> vector<8x1xf32>
    %47 = vector.broadcast %46 : vector<8x1xf32> to vector<8x16xf32>
    %48 = arith.mulf %39, %47 : vector<8x16xf32>
    %c0_27 = arith.constant 0 : index
    %c0_28 = arith.constant 0 : index
    %49 = vector.load %arg9[%c0_27, %c0_28] : memref<8x16xf32, #tpu.memory_space<vmem>>, vector<8x16xf32>
    tpu.vector_store %arg9[%c0_27, %c0_28], %48 {strides = array<i32>} : memref<8x16xf32, #tpu.memory_space<vmem>>, vector<8x16xf32>,
    return
  }
  func.func @transform_0(%arg0: i32) -> (i32, i32) {
    %c0_i32 = arith.constant 0 : i32
    %c0_i32_0 = arith.constant 0 : i32
    return %arg0, %c0_i32 : i32, i32
  }
  func.func @transform_1(%arg0: i32) -> (i32, i32) {
    %c0_i32 = arith.constant 0 : i32
    %c0_i32_0 = arith.constant 0 : i32
    %c0_i32_1 = arith.constant 0 : i32
    return %c0_i32, %c0_i32_0 : i32, i32
  }
  func.func @transform_2(%arg0: i32) -> (i32, i32) {
    %c0_i32 = arith.constant 0 : i32
    %c0_i32_0 = arith.constant 0 : i32
    %c0_i32_1 = arith.constant 0 : i32
    return %c0_i32, %c0_i32_0 : i32, i32
  }
  func.func @transform_3(%arg0: i32) -> (i32, i32) {
    %c0_i32 = arith.constant 0 : i32
    %c0_i32_0 = arith.constant 0 : i32
    %c0_i32_1 = arith.constant 0 : i32
    return %c0_i32, %c0_i32_0 : i32, i32
  }
  func.func @transform_4(%arg0: i32) -> (i32, i32) {
    %c0_i32 = arith.constant 0 : i32
    %c0_i32_0 = arith.constant 0 : i32
    %c0_i32_1 = arith.constant 0 : i32
    return %c0_i32, %c0_i32_0 : i32, i32
  }
  func.func @transform_5(%arg0: i32) -> (i32, i32) {
    %c0_i32 = arith.constant 0 : i32
    %c0_i32_0 = arith.constant 0 : i32
    %c0_i32_1 = arith.constant 0 : i32
    return %c0_i32, %c0_i32_0 : i32, i32
  }
  func.func @transform_6(%arg0: i32) -> (i32, i32) {
    %c0_i32 = arith.constant 0 : i32
    %c0_i32_0 = arith.constant 0 : i32
    %c0_i32_1 = arith.constant 0 : i32
    return %c0_i32, %c0_i32_0 : i32, i32
  }
  func.func @transform_7(%arg0: i32) -> (i32, i32) {
    %c0_i32 = arith.constant 0 : i32
    %c0_i32_0 = arith.constant 0 : i32
    return %arg0, %c0_i32 : i32, i32
  }
  func.func @transform_8(%arg0: i32) -> (i32, i32) {
    %c0_i32 = arith.constant 0 : i32
    %c0_i32_0 = arith.constant 0 : i32
    return %arg0, %c0_i32 : i32, i32
  }
}

</mosaic_0001>

<llo_original>
// kernel: tpu_custom_call.1
$region0: #{tpu_custom_call.1}
  #allocation0 [shape = 'u32[]', space=smem, size = 0x4, offset = 0x4, fixed_abs, tag = 'smem constant byte address 0x4 - core index']
  #allocation1 [shape = 'u32[144,128]{1,0:T(1,128)}', space=vmem, size = 0x12000, scoped, tag = 'internal scratch']
  %s0 = inlined_call_operand.vmem [shape: f32[8,32], index: 0, kind: input, shape index: {}]
  %s1 = inlined_call_operand.vmem [shape: f32[32,256], index: 1, kind: input, shape index: {}]
  %s2 = inlined_call_operand.vmem [shape: f32[1,256], index: 2, kind: input, shape index: {}]
  %s3 = inlined_call_operand.hbm [shape: f32[256,256], index: 3, kind: input, shape index: {}]
  %s4 = inlined_call_operand.vmem [shape: f32[1,256], index: 4, kind: input, shape index: {}]
  %s5 = inlined_call_operand.vmem [shape: f32[256,16], index: 5, kind: input, shape index: {}]
  %s6 = inlined_call_operand.vmem [shape: f32[1,16], index: 6, kind: input, shape index: {}]
  %s7 = inlined_call_operand.vmem [shape: s8[8,16], index: 7, kind: input, shape index: {}]
  %s8 = inlined_call_operand.hbm [shape: f32[8,16], index: 8, kind: output, shape index: {}]
  %s9 = sld [smem:[#allocation0]]
  $region46: #{tpu_custom_call.1} parent=0
    _
  %s11 = ssub.s32 1, %s9
  %s12 = scalar_select 0, %s11, %s9
  $region1: #{tpu_custom_call.1} parent=0
    #allocation2 [shape = 'u8[262144]{0}', space=vmem, size = 0x40000, scoped, tag = 'input window, operand 3, single buffered']
    #allocation3 [shape = 's32[1]{0}', space=sflag, size = 0x4, scoped, tag = 'scoped memory for tpu_custom_call.1']
    #allocation4 [shape = 's32[1]{0}', space=sflag, size = 0x4, scoped, tag = 'scoped memory for tpu_custom_call.1']
    #allocation5 [shape = 'u8[4096]{0}', space=vmem, size = 0x1000, scoped, tag = 'output window, operand 0, single buffered']
    %13 = vsyncpa [#allocation3], 0
    %14 = vsyncpa [#allocation4], 0
    // Predicated region
    $region2: #{tpu_custom_call.1} parent=1 // pred_check
      _
    $region3: #{tpu_custom_call.1} parent=1 // pred_check_branch
      %16 = sbr.rel (0) target = $region5
    $region4: #{tpu_custom_call.1} parent=1 // pred_region
      _
    $region5: #{tpu_custom_call.1} parent=1 // pred_fallthru
      _
    // Predicated region
    $region6: #{tpu_custom_call.1} parent=1 // pred_check
      _
    $region7: #{tpu_custom_call.1} parent=1 // pred_check_branch
      %18 = sbr.rel (0) target = $region9
    $region8: #{tpu_custom_call.1} parent=1 // pred_region
      _
    $region9: #{tpu_custom_call.1} parent=1 // pred_fallthru
      _
    // Predicated region
    $region10: #{tpu_custom_call.1} parent=1 // pred_check
      _
    $region11: #{tpu_custom_call.1} parent=1 // pred_check_branch
      %20 = sbr.rel (0) target = $region13
    $region12: #{tpu_custom_call.1} parent=1 // pred_region
      _
    $region13: #{tpu_custom_call.1} parent=1 // pred_fallthru
      _
    // Predicated region
    $region14: #{tpu_custom_call.1} parent=1 // pred_check
      _
    $region15: #{tpu_custom_call.1} parent=1 // pred_check_branch
      %22 = sbr.rel (0) target = $region17
    $region16: #{tpu_custom_call.1} parent=1 // pred_region
      %s24 = ssub.s32 8192, 8192
      %25 = vsyncadd [#allocation3], %s24
      %s26 = sshll.u32 [#allocation2], 4
      %s27 = int_to_ptr.vmem [resolvable:$true] %s26
      %32 = dma.hbm_to_vmem [thread:$0]  %s3, 8192, %s27, [#allocation3], 256, 256, 16
    $region17: #{tpu_custom_call.1} parent=1 // pred_fallthru
      _
    // Predicated region
    $region18: #{tpu_custom_call.1} parent=1 // pred_check
      _
    $region19: #{tpu_custom_call.1} parent=1 // pred_check_branch
      %34 = sbr.rel (0) target = $region21
    $region20: #{tpu_custom_call.1} parent=1 // pred_region
      _
    $region21: #{tpu_custom_call.1} parent=1 // pred_fallthru
      _
    // Predicated region
    $region22: #{tpu_custom_call.1} parent=1 // pred_check
      _
    $region23: #{tpu_custom_call.1} parent=1 // pred_check_branch
      %36 = sbr.rel (0) target = $region25
    $region24: #{tpu_custom_call.1} parent=1 // pred_region
      _
    $region25: #{tpu_custom_call.1} parent=1 // pred_fallthru
      _
    // Predicated region
    $region26: #{tpu_custom_call.1} parent=1 // pred_check
      _
    $region27: #{tpu_custom_call.1} parent=1 // pred_check_branch
      %38 = sbr.rel (0) target = $region29
    $region28: #{tpu_custom_call.1} parent=1 // pred_region
      _
    $region29: #{tpu_custom_call.1} parent=1 // pred_fallthru
      _
    // Predicated region
    $region30: #{tpu_custom_call.1} parent=1 // pred_check
      _
    $region31: #{tpu_custom_call.1} parent=1 // pred_check_branch
      %40 = sbr.rel (0) target = $region33
    $region32: #{tpu_custom_call.1} parent=1 // pred_region
      _
    $region33: #{tpu_custom_call.1} parent=1 // pred_fallthru
      _
    // Predicated region
    $region34: #{tpu_custom_call.1} parent=1 // pred_check
      _
    $region35: #{tpu_custom_call.1} parent=1 // pred_check_branch
      %42 = sbr.rel (0) target = $region37
    $region36: #{tpu_custom_call.1} parent=1 // pred_region
      %43 = dma.done [#allocation3], 8192
    $region37: #{tpu_custom_call.1} parent=1 // pred_fallthru
      _
    %v46 = vld [vmem:[%s0] sm:$0xff]
    %v47 = vld [vmem:[%s1] sm:$0xff]
    %v48 = vld [vmem:[%s1 + $0x8] sm:$0xff]
    %v49 = vld [vmem:[%s1 + $0x10] sm:$0xff]
    %v50 = vld [vmem:[%s1 + $0x18] sm:$0xff]
    %v51 = vld [vmem:[%s1 + $0x20] sm:$0xff]
    %v52 = vld [vmem:[%s1 + $0x28] sm:$0xff]
    %v53 = vld [vmem:[%s1 + $0x30] sm:$0xff]
    %v54 = vld [vmem:[%s1 + $0x38] sm:$0xff]
    %v55 = vld [vmem:[%s2] sm:$0x3]
    %v57 = vlaneseq
    %v58 = vshrl.u32 %v57, 7
    %v59 = vsub.s32 0, %v58
    %v60 = vrot.slane %v55, %v59
    %v61 = vlaneseq
    %v62 = vshrl.u32 %v61, 7
    %v63 = vsub.s32 1, %v62
    %v64 = vrot.slane %v55, %v63
    %vm67 = vcmask 261120
    %v69 = vsel %vm67, %v46, 0
    %71 = vmatprep.subr.mxu0 %v48
    %72 = vmatpush1.msra.mxu0 %v47
    %73 = vmatprep.subr.mxu0 %v50
    %74 = vmatpush1.msra.mxu0 %v49
    %75 = vmatprep.subr.mxu0 %v52
    %76 = vmatpush1.msra.mxu0 %v51
    %77 = vmatprep.subr.mxu0 %v54
    %78 = vmatpush1.msra.mxu0 %v53
    %79 = vmatprep.subr.mxu0 0.0
    %80 = vmatpush1.msra.mxu0 0.0
    %81 = vmatprep.subr.mxu0 0.0
    %82 = vmatpush1.msra.mxu0 0.0
    %83 = vmatprep.subr.mxu0 0.0
    %84 = vmatpush1.msra.mxu0 0.0
    %85 = vmatprep.subr.mxu0 0.0
    %86 = vmatpush1.msra.mxu0 0.0
    %87 = vmatprep.subr.mxu0 0.0
    %88 = vmatpush1.msra.mxu0 0.0
    %89 = vmatprep.subr.mxu0 0.0
    %90 = vmatpush1.msra.mxu0 0.0
    %91 = vmatprep.subr.mxu0 0.0
    %92 = vmatpush1.msra.mxu0 0.0
    %93 = vmatprep.subr.mxu0 0.0
    %94 = vmatpush1.msra.mxu0 0.0
    %95 = vmatprep.subr.mxu0 0.0
    %96 = vmatpush1.msra.mxu0 0.0
    %97 = vmatprep.subr.mxu0 0.0
    %98 = vmatpush1.msra.mxu0 0.0
    %99 = vmatprep.subr.mxu0 0.0
    %100 = vmatpush1.msra.mxu0 0.0
    %101 = vmatprep.subr.mxu0 0.0
    %102 = vmatpush1.msra.mxu0 0.0
    %103 = vmatprep.subr.mxu0 0.0
    %104 = vmatpush1.msra.mxu0 0.0
    %105 = vmatprep.subr.mxu0 0.0
    %106 = vmatpush1.msra.mxu0 0.0
    %107 = vmatprep.subr.mxu0 0.0
    %108 = vmatpush1.msra.mxu0 0.0
    %109 = vmatprep.subr.mxu0 0.0
    %110 = vmatpush1.msra.mxu0 0.0
    %111 = vmatprep.subr.mxu0 0.0
    %112 = vmatpush1.msra.mxu0 0.0
    %113 = vmatprep.subr.mxu0 0.0
    %114 = vmatpush1.msra.mxu0 0.0
    %115 = vmatprep.subr.mxu0 0.0
    %116 = vmatpush1.msra.mxu0 0.0
    %117 = vmatprep.subr.mxu0 0.0
    %118 = vmatpush1.msra.mxu0 0.0
    %119 = vmatprep.subr.mxu0 0.0
    %120 = vmatpush1.msra.mxu0 0.0
    %121 = vmatprep.subr.mxu0 0.0
    %122 = vmatpush1.msra.mxu0 0.0
    %123 = vmatprep.subr.mxu0 0.0
    %124 = vmatpush1.msra.mxu0 0.0
    %125 = vmatprep.subr.mxu0 0.0
    %126 = vmatpush1.msra.mxu0 0.0
    %127 = vmatprep.subr.mxu0 0.0
    %128 = vmatpush1.msra.mxu0 0.0
    %129 = vmatprep.subr.mxu0 0.0
    %130 = vmatpush1.msra.mxu0 0.0
    %131 = vmatprep.subr.mxu0 0.0
    %132 = vmatpush1.msra.mxu0 0.0
    %133 = vmatprep.subr.mxu0 0.0
    %134 = vmatpush1.msra.mxu0 0.0
    %135 = vmatprep.mubr.f32.mxu0 0.0
    %136 = vmatmul.mubr.f32.gmra.mrb[0].mxu0 %v69
    %v137 = vpop.f32.mrb[0].mxu0
    %v138 = vadd.f32 %v60, %v137
    %v139 = vpop.f32.mrb[0].mxu0
    %v140 = vadd.f32 %v64, %v139
    %141 = vdwg.mxu0
    %vm142 = vcmp.gt.f32.partialorder %v138, 0.0
    %vm143 = vcmp.gt.f32.partialorder %v140, 0.0
    %v144 = vmul.f32 %v138, 1.442695
    %v145 = vpow.pop %v144
    %v146 = vmul.f32 %v140, 1.442695
    %v147 = vpow.pop %v146
    %v148 = vsub.f32 %v145, 1.0
    %v149 = vsub.f32 %v147, 1.0
    %v150 = vsel %vm142, %v138, %v148
    %v151 = vsel %vm143, %v140, %v149
    %v152 = vld [vmem:[#allocation2] sm:$0xff]
    %v153 = vld [vmem:[#allocation2 + $0x8] sm:$0xff]
    %v154 = vld [vmem:[#allocation2 + $0x10] sm:$0xff]
    %v155 = vld [vmem:[#allocation2 + $0x18] sm:$0xff]
    %v156 = vld [vmem:[#allocation2 + $0x20] sm:$0xff]
    %v157 = vld [vmem:[#allocation2 + $0x28] sm:$0xff]
    %v158 = vld [vmem:[#allocation2 + $0x30] sm:$0xff]
    %v159 = vld [vmem:[#allocation2 + $0x38] sm:$0xff]
    %v160 = vld [vmem:[#allocation2 + $0x40] sm:$0xff]
    %v161 = vld [vmem:[#allocation2 + $0x48] sm:$0xff]
    %v162 = vld [vmem:[#allocation2 + $0x50] sm:$0xff]
    %v163 = vld [vmem:[#allocation2 + $0x58] sm:$0xff]
    %v164 = vld [vmem:[#allocation2 + $0x60] sm:$0xff]
    %v165 = vld [vmem:[#allocation2 + $0x68] sm:$0xff]
    %v166 = vld [vmem:[#allocation2 + $0x70] sm:$0xff]
    %v167 = vld [vmem:[#allocation2 + $0x78] sm:$0xff]
    %v168 = vld [vmem:[#allocation2 + $0x80] sm:$0xff]
    %v169 = vld [vmem:[#allocation2 + $0x88] sm:$0xff]
    %v170 = vld [vmem:[#allocation2 + $0x90] sm:$0xff]
    %v171 = vld [vmem:[#allocation2 + $0x98] sm:$0xff]
    %v172 = vld [vmem:[#allocation2 + $0xa0] sm:$0xff]
    %v173 = vld [vmem:[#allocation2 + $0xa8] sm:$0xff]
    %v174 = vld [vmem:[#allocation2 + $0xb0] sm:$0xff]
    %v175 = vld [vmem:[#allocation2 + $0xb8] sm:$0xff]
    %v176 = vld [vmem:[#allocation2 + $0xc0] sm:$0xff]
    %v177 = vld [vmem:[#allocation2 + $0xc8] sm:$0xff]
    %v178 = vld [vmem:[#allocation2 + $0xd0] sm:$0xff]
    %v179 = vld [vmem:[#allocation2 + $0xd8] sm:$0xff]
    %v180 = vld [vmem:[#allocation2 + $0xe0] sm:$0xff]
    %v181 = vld [vmem:[#allocation2 + $0xe8] sm:$0xff]
    %v182 = vld [vmem:[#allocation2 + $0xf0] sm:$0xff]
    %v183 = vld [vmem:[#allocation2 + $0xf8] sm:$0xff]
    %v184 = vld [vmem:[#allocation2 + $0x100] sm:$0xff]
    %v185 = vld [vmem:[#allocation2 + $0x108] sm:$0xff]
    %v186 = vld [vmem:[#allocation2 + $0x110] sm:$0xff]
    %v187 = vld [vmem:[#allocation2 + $0x118] sm:$0xff]
    %v188 = vld [vmem:[#allocation2 + $0x120] sm:$0xff]
    %v189 = vld [vmem:[#allocation2 + $0x128] sm:$0xff]
    %v190 = vld [vmem:[#allocation2 + $0x130] sm:$0xff]
    %v191 = vld [vmem:[#allocation2 + $0x138] sm:$0xff]
    %v192 = vld [vmem:[#allocation2 + $0x140] sm:$0xff]
    %v193 = vld [vmem:[#allocation2 + $0x148] sm:$0xff]
    %v194 = vld [vmem:[#allocation2 + $0x150] sm:$0xff]
    %v195 = vld [vmem:[#allocation2 + $0x158] sm:$0xff]
    %v196 = vld [vmem:[#allocation2 + $0x160] sm:$0xff]
    %v197 = vld [vmem:[#allocation2 + $0x168] sm:$0xff]
    %v198 = vld [vmem:[#allocation2 + $0x170] sm:$0xff]
    %v199 = vld [vmem:[#allocation2 + $0x178] sm:$0xff]
    %v200 = vld [vmem:[#allocation2 + $0x180] sm:$0xff]
    %v201 = vld [vmem:[#allocation2 + $0x188] sm:$0xff]
    %v202 = vld [vmem:[#allocation2 + $0x190] sm:$0xff]
    %v203 = vld [vmem:[#allocation2 + $0x198] sm:$0xff]
    %v204 = vld [vmem:[#allocation2 + $0x1a0] sm:$0xff]
    %v205 = vld [vmem:[#allocation2 + $0x1a8] sm:$0xff]
    %v206 = vld [vmem:[#allocation2 + $0x1b0] sm:$0xff]
    %v207 = vld [vmem:[#allocation2 + $0x1b8] sm:$0xff]
    %v208 = vld [vmem:[#allocation2 + $0x1c0] sm:$0xff]
    %v209 = vld [vmem:[#allocation2 + $0x1c8] sm:$0xff]
    %v210 = vld [vmem:[#allocation2 + $0x1d0] sm:$0xff]
    %v211 = vld [vmem:[#allocation2 + $0x1d8] sm:$0xff]
    %v212 = vld [vmem:[#allocation2 + $0x1e0] sm:$0xff]
    %v213 = vld [vmem:[#allocation2 + $0x1e8] sm:$0xff]
    %v214 = vld [vmem:[#allocation2 + $0x1f0] sm:$0xff]
    %v215 = vld [vmem:[#allocation2 + $0x1f8] sm:$0xff]
    %v216 = vld [vmem:[%s4] sm:$0x3]
    %v218 = vlaneseq
    %v219 = vshrl.u32 %v218, 7
    %v220 = vsub.s32 0, %v219
    %v221 = vrot.slane %v216, %v220
    %v222 = vlaneseq
    %v223 = vshrl.u32 %v222, 7
    %v224 = vsub.s32 1, %v223
    %v225 = vrot.slane %v216, %v224
    %228 = vmatprep.subr.mxu0 %v153
    %229 = vmatpush1.msra.mxu0 %v152
    %230 = vmatprep.subr.mxu0 %v155
    %231 = vmatpush1.msra.mxu0 %v154
    %232 = vmatprep.subr.mxu0 %v157
    %233 = vmatpush1.msra.mxu0 %v156
    %234 = vmatprep.subr.mxu0 %v159
    %235 = vmatpush1.msra.mxu0 %v158
    %236 = vmatprep.subr.mxu0 %v161
    %237 = vmatpush1.msra.mxu0 %v160
    %238 = vmatprep.subr.mxu0 %v163
    %239 = vmatpush1.msra.mxu0 %v162
    %240 = vmatprep.subr.mxu0 %v165
    %241 = vmatpush1.msra.mxu0 %v164
    %242 = vmatprep.subr.mxu0 %v167
    %243 = vmatpush1.msra.mxu0 %v166
    %244 = vmatprep.subr.mxu0 %v169
    %245 = vmatpush1.msra.mxu0 %v168
    %246 = vmatprep.subr.mxu0 %v171
    %247 = vmatpush1.msra.mxu0 %v170
    %248 = vmatprep.subr.mxu0 %v173
    %249 = vmatpush1.msra.mxu0 %v172
    %250 = vmatprep.subr.mxu0 %v175
    %251 = vmatpush1.msra.mxu0 %v174
    %252 = vmatprep.subr.mxu0 %v177
    %253 = vmatpush1.msra.mxu0 %v176
    %254 = vmatprep.subr.mxu0 %v179
    %255 = vmatpush1.msra.mxu0 %v178
    %256 = vmatprep.subr.mxu0 %v181
    %257 = vmatpush1.msra.mxu0 %v180
    %258 = vmatprep.subr.mxu0 %v183
    %259 = vmatpush1.msra.mxu0 %v182
    %260 = vmatprep.subr.mxu0 %v185
    %261 = vmatpush1.msra.mxu0 %v184
    %262 = vmatprep.subr.mxu0 %v187
    %263 = vmatpush1.msra.mxu0 %v186
    %264 = vmatprep.subr.mxu0 %v189
    %265 = vmatpush1.msra.mxu0 %v188
    %266 = vmatprep.subr.mxu0 %v191
    %267 = vmatpush1.msra.mxu0 %v190
    %268 = vmatprep.subr.mxu0 %v193
    %269 = vmatpush1.msra.mxu0 %v192
    %270 = vmatprep.subr.mxu0 %v195
    %271 = vmatpush1.msra.mxu0 %v194
    %272 = vmatprep.subr.mxu0 %v197
    %273 = vmatpush1.msra.mxu0 %v196
    %274 = vmatprep.subr.mxu0 %v199
    %275 = vmatpush1.msra.mxu0 %v198
    %276 = vmatprep.subr.mxu0 %v201
    %277 = vmatpush1.msra.mxu0 %v200
    %278 = vmatprep.subr.mxu0 %v203
    %279 = vmatpush1.msra.mxu0 %v202
    %280 = vmatprep.subr.mxu0 %v205
    %281 = vmatpush1.msra.mxu0 %v204
    %282 = vmatprep.subr.mxu0 %v207
    %283 = vmatpush1.msra.mxu0 %v206
    %284 = vmatprep.subr.mxu0 %v209
    %285 = vmatpush1.msra.mxu0 %v208
    %286 = vmatprep.subr.mxu0 %v211
    %287 = vmatpush1.msra.mxu0 %v210
    %288 = vmatprep.subr.mxu0 %v213
    %289 = vmatpush1.msra.mxu0 %v212
    %290 = vmatprep.subr.mxu0 %v215
    %291 = vmatpush1.msra.mxu0 %v214
    %292 = vmatprep.mubr.f32.mxu0 %v151
    %293 = vmatmul.mubr.f32.gmra.mrb[0].mxu0 %v150
    %v294 = vpop.f32.mrb[0].mxu0
    %v295 = vadd.f32 %v221, %v294
    %v296 = vpop.f32.mrb[0].mxu0
    %v297 = vadd.f32 %v225, %v296
    %298 = vdwg.mxu0
    %vm299 = vcmp.gt.f32.partialorder %v295, 0.0
    %vm300 = vcmp.gt.f32.partialorder %v297, 0.0
    %v301 = vmul.f32 %v295, 1.442695
    %v302 = vpow.pop %v301
    %v303 = vmul.f32 %v297, 1.442695
    %v304 = vpow.pop %v303
    %v305 = vsub.f32 %v302, 1.0
    %v306 = vsub.f32 %v304, 1.0
    %v307 = vsel %vm299, %v295, %v305
    %v308 = vsel %vm300, %v297, %v306
    %v309 = vld [vmem:[%s5] sm:$0xff]
    %v310 = vld [vmem:[%s5 + $0x8] sm:$0xff]
    %v311 = vld [vmem:[%s5 + $0x10] sm:$0xff]
    %v312 = vld [vmem:[%s5 + $0x18] sm:$0xff]
    %v313 = vld [vmem:[%s5 + $0x20] sm:$0xff]
    %v314 = vld [vmem:[%s5 + $0x28] sm:$0xff]
    %v315 = vld [vmem:[%s5 + $0x30] sm:$0xff]
    %v316 = vld [vmem:[%s5 + $0x38] sm:$0xff]
    %v317 = vld [vmem:[%s5 + $0x40] sm:$0xff]
    %v318 = vld [vmem:[%s5 + $0x48] sm:$0xff]
    %v319 = vld [vmem:[%s5 + $0x50] sm:$0xff]
    %v320 = vld [vmem:[%s5 + $0x58] sm:$0xff]
    %v321 = vld [vmem:[%s5 + $0x60] sm:$0xff]
    %v322 = vld [vmem:[%s5 + $0x68] sm:$0xff]
    %v323 = vld [vmem:[%s5 + $0x70] sm:$0xff]
    %v324 = vld [vmem:[%s5 + $0x78] sm:$0xff]
    %v325 = vld [vmem:[%s5 + $0x80] sm:$0xff]
    %v326 = vld [vmem:[%s5 + $0x88] sm:$0xff]
    %v327 = vld [vmem:[%s5 + $0x90] sm:$0xff]
    %v328 = vld [vmem:[%s5 + $0x98] sm:$0xff]
    %v329 = vld [vmem:[%s5 + $0xa0] sm:$0xff]
    %v330 = vld [vmem:[%s5 + $0xa8] sm:$0xff]
    %v331 = vld [vmem:[%s5 + $0xb0] sm:$0xff]
    %v332 = vld [vmem:[%s5 + $0xb8] sm:$0xff]
    %v333 = vld [vmem:[%s5 + $0xc0] sm:$0xff]
    %v334 = vld [vmem:[%s5 + $0xc8] sm:$0xff]
    %v335 = vld [vmem:[%s5 + $0xd0] sm:$0xff]
    %v336 = vld [vmem:[%s5 + $0xd8] sm:$0xff]
    %v337 = vld [vmem:[%s5 + $0xe0] sm:$0xff]
    %v338 = vld [vmem:[%s5 + $0xe8] sm:$0xff]
    %v339 = vld [vmem:[%s5 + $0xf0] sm:$0xff]
    %v340 = vld [vmem:[%s5 + $0xf8] sm:$0xff]
    %v341 = vld [vmem:[%s6] sm:$0x1]
    %v343 = vlaneseq
    %v344 = vshrl.u32 %v343, 7
    %v345 = vsub.s32 0, %v344
    %v346 = vrot.slane %v341, %v345
    %348 = vmatprep.subr.mxu0 0.0
    %349 = vmatpush1.msra.mxu0 %v309
    %350 = vmatprep.subr.mxu0 0.0
    %351 = vmatpush1.msra.mxu0 %v310
    %352 = vmatprep.subr.mxu0 0.0
    %353 = vmatpush1.msra.mxu0 %v311
    %354 = vmatprep.subr.mxu0 0.0
    %355 = vmatpush1.msra.mxu0 %v312
    %356 = vmatprep.subr.mxu0 0.0
    %357 = vmatpush1.msra.mxu0 %v313
    %358 = vmatprep.subr.mxu0 0.0
    %359 = vmatpush1.msra.mxu0 %v314
    %360 = vmatprep.subr.mxu0 0.0
    %361 = vmatpush1.msra.mxu0 %v315
    %362 = vmatprep.subr.mxu0 0.0
    %363 = vmatpush1.msra.mxu0 %v316
    %364 = vmatprep.subr.mxu0 0.0
    %365 = vmatpush1.msra.mxu0 %v317
    %366 = vmatprep.subr.mxu0 0.0
    %367 = vmatpush1.msra.mxu0 %v318
    %368 = vmatprep.subr.mxu0 0.0
    %369 = vmatpush1.msra.mxu0 %v319
    %370 = vmatprep.subr.mxu0 0.0
    %371 = vmatpush1.msra.mxu0 %v320
    %372 = vmatprep.subr.mxu0 0.0
    %373 = vmatpush1.msra.mxu0 %v321
    %374 = vmatprep.subr.mxu0 0.0
    %375 = vmatpush1.msra.mxu0 %v322
    %376 = vmatprep.subr.mxu0 0.0
    %377 = vmatpush1.msra.mxu0 %v323
    %378 = vmatprep.subr.mxu0 0.0
    %379 = vmatpush1.msra.mxu0 %v324
    %380 = vmatprep.subr.mxu0 0.0
    %381 = vmatpush1.msra.mxu0 %v325
    %382 = vmatprep.subr.mxu0 0.0
    %383 = vmatpush1.msra.mxu0 %v326
    %384 = vmatprep.subr.mxu0 0.0
    %385 = vmatpush1.msra.mxu0 %v327
    %386 = vmatprep.subr.mxu0 0.0
    %387 = vmatpush1.msra.mxu0 %v328
    %388 = vmatprep.subr.mxu0 0.0
    %389 = vmatpush1.msra.mxu0 %v329
    %390 = vmatprep.subr.mxu0 0.0
    %391 = vmatpush1.msra.mxu0 %v330
    %392 = vmatprep.subr.mxu0 0.0
    %393 = vmatpush1.msra.mxu0 %v331
    %394 = vmatprep.subr.mxu0 0.0
    %395 = vmatpush1.msra.mxu0 %v332
    %396 = vmatprep.subr.mxu0 0.0
    %397 = vmatpush1.msra.mxu0 %v333
    %398 = vmatprep.subr.mxu0 0.0
    %399 = vmatpush1.msra.mxu0 %v334
    %400 = vmatprep.subr.mxu0 0.0
    %401 = vmatpush1.msra.mxu0 %v335
    %402 = vmatprep.subr.mxu0 0.0
    %403 = vmatpush1.msra.mxu0 %v336
    %404 = vmatprep.subr.mxu0 0.0
    %405 = vmatpush1.msra.mxu0 %v337
    %406 = vmatprep.subr.mxu0 0.0
    %407 = vmatpush1.msra.mxu0 %v338
    %408 = vmatprep.subr.mxu0 0.0
    %409 = vmatpush1.msra.mxu0 %v339
    %410 = vmatprep.subr.mxu0 0.0
    %411 = vmatpush1.msra.mxu0 %v340
    %412 = vmatprep.mubr.f32.mxu0 %v308
    %413 = vmatmul.mubr.f32.gmra.mrb[0].mxu0 %v307
    %v414 = vpop.f32.mrb[0].mxu0
    %v415 = vadd.f32 %v346, %v414
    %v416 = vpop.f32.mrb[0].mxu0
    %417 = vdwg.mxu0
    %v418 = vld [vmem:[%s7] sm:$0x3]
    %vm419 = vnez %v418
    %v420 = vsel %vm419, 16843009, 0
    %v421 = vunpack.c.0.s8 %v420
    %vm422 = vcmp.ne.s32.totalorder %v421, 0
    %v423 = vsel %vm422, %v415, -1e+30
    %vm424 = vcmask 130048
    %v425 = vsel %vm424, %v423, -inf
    %426 = vmax.xlane.f32.xlu0 %v425
    %v427 = vpop.xlane.xlu0 %426
    %v428 = vsub.f32 %v423, %v427
    %v429 = vmul.f32 %v428, 1.442695
    %v430 = vpow.pop %v429
    %v431 = vsel %vm422, %v430, 0.0
    %v432 = vsel %vm424, %v431, 0.0
    %433 = vadd.xlane.f32.xlu0 %v432
    %v434 = vpop.xlane.xlu0 %433
    %vm435 = vcmp.gt.f32.partialorder %v434, 0.0
    %v436 = vsel %vm435, %v434, 1.0
    %v437 = vrcp.pop %v436
    %v438 = vmul.f32 %v431, %v437
    %439 = vst.msk [vmem:[#allocation5] sm:$0xff] %vm424, %v438
    // Predicated region
    $region38: #{tpu_custom_call.1} parent=1 // pred_check
      _
    $region39: #{tpu_custom_call.1} parent=1 // pred_check_branch
      %441 = sbr.rel (0) target = $region41
    $region40: #{tpu_custom_call.1} parent=1 // pred_region
      %s443 = ssub.s32 128, 128
      %444 = vsyncadd [#allocation4], %s443
      %s446 = sshll.u32 [#allocation5], 4
      %s447 = int_to_ptr.vmem [resolvable:$true] %s446
      %449 = dma.vmem_to_hbm [thread:$0]  %s447, 128, %s8, [#allocation4]
    $region41: #{tpu_custom_call.1} parent=1 // pred_fallthru
      _
    // Predicated region
    $region42: #{tpu_custom_call.1} parent=1 // pred_check
      _
    $region43: #{tpu_custom_call.1} parent=1 // pred_check_branch
      %451 = sbr.rel (0) target = $region45
    $region44: #{tpu_custom_call.1} parent=1 // pred_region
      %452 = dma.done [#allocation4], 128
    $region45: #{tpu_custom_call.1} parent=1 // pred_fallthru
      _
    %453 = vsyncpa [#allocation3], 1
    %454 = vsyncpa [#allocation4], 1

</llo_original>
